<compile_context>
chip_gen: v7x
topology: tpu7x:2x2x1
jax: 0.10.0
libtpu: 0.0.40
codegen_flags: <defaults>
</compile_context>

<pallas_src>
import functools

import jax
import jax.numpy as jnp
import numpy as np
from jax import lax
from jax.experimental import pallas as pl
from jax.experimental.pallas import tpu as pltpu


def _finalize_loss(cross_raw, lse, T, S, half, inv_student_temp):
    """cross_raw[r, v] = p_teacher[r] . student_raw[v]; lse[v] = logsumexp of scaled student row."""
    r_idx = lax.broadcasted_iota(jnp.int32, (T, S), 0)
    v_idx = lax.broadcasted_iota(jnp.int32, (T, S), 1)
    chunk_id = jnp.where(r_idx < half, 0, 1)
    keep = v_idx != chunk_id
    # student-temp scale folded into the (tiny) final reduction, not the big dot
    part2 = jnp.sum(jnp.where(keep, cross_raw, 0.0),
                    keepdims=True) * (inv_student_temp / half)          # (1, 1)
    v_col = lax.broadcasted_iota(jnp.int32, (S, 1), 0)
    cnt = jnp.where(v_col < 2, 1.0, 2.0)     # #teacher-chunks iq with iq != v
    part1 = jnp.sum(cnt * lse, keepdims=True)                           # (1, 1)
    n_loss_terms = 2 * S - min(S, 2)
    return (part1 - part2) * (1.0 / n_loss_terms)


# ----------------------------------------------------------------------------
# Fast path: whole out_dim in one block, no online-softmax state.
# ----------------------------------------------------------------------------
def _dino_loss_fused_kernel(inv_temp_ref, student_ref, teacher_ref, center_ref,
                            loss_ref, new_center_ref,
                            *, inv_student_temp, center_momentum):
    T = teacher_ref.shape[0]
    S = student_ref.shape[0]
    half = T // 2
    inv_temp = inv_temp_ref[0]

    t_raw = teacher_ref[...]
    s_raw = student_ref[...]
    c = center_ref[...]                                          # f32 (1, D)

    # teacher softmax stats (fused cast + center-subtract + temp scale)
    tl = (t_raw.astype(jnp.float32) - c) * inv_temp              # (T, D)
    m_t = jnp.max(tl, axis=-1, keepdims=True)
    e_t = jnp.exp(tl - m_t)
    z_t = jnp.sum(e_t, axis=-1, keepdims=True)

    # bf16 MXU operands, f32 accumulation; student kept RAW (un-scaled)
    acc = lax.dot_general(e_t.astype(jnp.bfloat16), s_raw.astype(jnp.bfloat16),
                          (((1,), (1,)), ((), ())),
                          preferred_element_type=jnp.float32)    # (T, S)
    cross = acc * pl.reciprocal(z_t, approx=False)

    # student log-sum-exp on the scaled f32 copy
    s_scaled = s_raw.astype(jnp.float32) * inv_student_temp
    m_s = jnp.max(s_scaled, axis=-1, keepdims=True)
    lse = m_s + jnp.log(jnp.sum(jnp.exp(s_scaled - m_s), axis=-1, keepdims=True))

    loss_ref[...] = _finalize_loss(cross, lse, T, S, half, inv_student_temp)

    # center EMA
    col_sum = jnp.sum(t_raw.astype(jnp.float32), axis=0, keepdims=True)
    new_center_ref[...] = (c * center_momentum
                           + col_sum * ((1.0 - center_momentum) / T))


# ----------------------------------------------------------------------------
# Streaming path: out_dim tiled, online teacher softmax + streaming student LSE.
# ----------------------------------------------------------------------------
def _dino_loss_tiled_kernel(inv_temp_ref, student_ref, teacher_ref, center_ref,
                            loss_ref, new_center_ref,
                            acc_ref, mt_ref, zt_ref, ms_ref, zs_ref,
                            *, inv_student_temp, center_momentum):
    d = pl.program_id(0)
    nd = pl.num_programs(0)
    T = teacher_ref.shape[0]
    S = student_ref.shape[0]
    half = T // 2
    inv_temp = inv_temp_ref[0]

    @pl.when(d == 0)
    def _init():
        acc_ref[...] = jnp.zeros_like(acc_ref)
        mt_ref[...] = jnp.full_like(mt_ref, -jnp.inf)
        zt_ref[...] = jnp.zeros_like(zt_ref)
        ms_ref[...] = jnp.full_like(ms_ref, -jnp.inf)
        zs_ref[...] = jnp.zeros_like(zs_ref)

    t_raw = teacher_ref[...]                                     # (T, blk) native dtype
    s_raw = student_ref[...]                                     # (S, blk) native dtype
    c = center_ref[...]                                          # (1, blk) f32

    # ---- teacher: online softmax stats + rescaled dot accumulator ----------
    tl = (t_raw.astype(jnp.float32) - c) * inv_temp              # (T, blk)
    bmax_t = jnp.max(tl, axis=-1, keepdims=True)
    mt_new = jnp.maximum(mt_ref[...], bmax_t)
    alpha_t = jnp.exp(mt_ref[...] - mt_new)                      # (T, 1)
    e_t = jnp.exp(tl - mt_new)                                   # (T, blk)
    zt_ref[...] = alpha_t * zt_ref[...] + jnp.sum(e_t, axis=-1, keepdims=True)
    mt_ref[...] = mt_new

    # acc[r, v] += sum_j e_t[r, j] * s_raw[v, j]   (bf16 MXU, f32 accumulate)
    blk_dot = lax.dot_general(e_t.astype(jnp.bfloat16), s_raw.astype(jnp.bfloat16),
                              (((1,), (1,)), ((), ())),
                              preferred_element_type=jnp.float32)  # (T, S)
    acc_ref[...] = alpha_t * acc_ref[...] + blk_dot

    # ---- student: streaming log-sum-exp (never materialize log-softmax) ----
    s_scaled = s_raw.astype(jnp.float32) * inv_student_temp
    bmax_s = jnp.max(s_scaled, axis=-1, keepdims=True)
    ms_new = jnp.maximum(ms_ref[...], bmax_s)
    alpha_s = jnp.exp(ms_ref[...] - ms_new)
    zs_ref[...] = (alpha_s * zs_ref[...]
                   + jnp.sum(jnp.exp(s_scaled - ms_new), axis=-1, keepdims=True))
    ms_ref[...] = ms_new

    # ---- center EMA, fused per D-block --------------------------------------
    col_sum = jnp.sum(t_raw.astype(jnp.float32), axis=0, keepdims=True)
    new_center_ref[...] = (c * center_momentum
                           + col_sum * ((1.0 - center_momentum) / T))

    # ---- finalize loss on the last D-block ----------------------------------
    @pl.when(d == nd - 1)
    def _finalize():
        cross = acc_ref[...] * pl.reciprocal(zt_ref[...], approx=False)   # (T, S)
        lse = ms_ref[...] + jnp.log(zs_ref[...])                          # (S, 1)
        loss_ref[...] = _finalize_loss(cross, lse, T, S, half, inv_student_temp)


# ----------------------------------------------------------------------------
# Wrapper
# ----------------------------------------------------------------------------
def dino_loss_pallas(student_output, teacher_output, center, temp,
                     student_temp=0.1, center_momentum=0.9, block_d=8192,
                     force_tiled=False):
    S, D = student_output.shape
    T, D2 = teacher_output.shape
    assert D == D2, "student/teacher out_dim mismatch"
    assert center.shape == (1, D)
    assert T % 2 == 0, "teacher_output rows must split into 2 equal chunks"

    inv_temp_arr = jnp.asarray(1.0 / float(temp), jnp.float32).reshape((1,))
    center = center.astype(jnp.float32)
    inv_student_temp = 1.0 / float(student_temp)
    s_b = student_output.dtype.itemsize
    t_b = teacher_output.dtype.itemsize

    # --- tiling decision ------------------------------------------------------
    block_d = min(block_d, D)
    if D % block_d != 0 or block_d % 128 != 0:
        block_d = D                       # full-width block always legal
    small_rows = (S + T) * D * 4 <= (4 << 20)     # f32 working set per full pass
    use_fused = (not force_tiled) and (small_rows or block_d == D)
    if use_fused:
        block_d = D
    n_blocks = D // block_d

    # --- right-sized VMEM budget (footprint * 2 + headroom) -------------------
    if use_fused:
        need = S * D * (s_b + 12) + T * D * (t_b + 12) + D * 16 + T * S * 8
    else:
        need = (2 * block_d * (S * s_b + T * t_b + 8)      # double-buffered in/out
                + block_d * (S + T) * 8                    # f32 working copies
                + T * S * 4 + 16 * (S + T))                # resident acc + stats
    vmem_limit = max(16 << 20, min(2 * int(need) + (8 << 20), 96 << 20))

    if use_fused:
        kernel = functools.partial(_dino_loss_fused_kernel,
                                   inv_student_temp=inv_student_temp,
                                   center_momentum=float(center_momentum))
        loss, new_center = pl.pallas_call(
            kernel,
            out_shape=(jax.ShapeDtypeStruct((1, 1), jnp.float32),
                       jax.ShapeDtypeStruct((1, D), jnp.float32)),
            grid=(1,),
            in_specs=[
                pl.BlockSpec(memory_space=pltpu.MemorySpace.SMEM),   # 1/temp
                pl.BlockSpec((S, D), lambda i: (0, 0)),
                pl.BlockSpec((T, D), lambda i: (0, 0)),
                pl.BlockSpec((1, D), lambda i: (0, 0)),
            ],
            out_specs=(
                pl.BlockSpec((1, 1), lambda i: (0, 0)),
                pl.BlockSpec((1, D), lambda i: (0, 0)),
            ),
            input_output_aliases={3: 1},
            compiler_params=pltpu.CompilerParams(
                dimension_semantics=("arbitrary",),
                vmem_limit_bytes=vmem_limit),
        )(inv_temp_arr, student_output, teacher_output, center)
        return loss[0, 0], new_center

    kernel = functools.partial(_dino_loss_tiled_kernel,
                               inv_student_temp=inv_student_temp,
                               center_momentum=float(center_momentum))
    loss, new_center = pl.pallas_call(
        kernel,
        out_shape=(jax.ShapeDtypeStruct((1, 1), jnp.float32),
                   jax.ShapeDtypeStruct((1, D), jnp.float32)),
        grid=(n_blocks,),
        in_specs=[
            pl.BlockSpec(memory_space=pltpu.MemorySpace.SMEM),       # 1/temp
            pl.BlockSpec((S, block_d), lambda d: (0, d)),            # student
            pl.BlockSpec((T, block_d), lambda d: (0, d)),            # teacher
            pl.BlockSpec((1, block_d), lambda d: (0, d)),            # center
        ],
        out_specs=(
            pl.BlockSpec((1, 1), lambda d: (0, 0)),                  # loss (resident)
            pl.BlockSpec((1, block_d), lambda d: (0, d)),            # new center
        ),
        scratch_shapes=[
            pltpu.VMEM((T, S), jnp.float32),   # running weighted-dot accumulator
            pltpu.VMEM((T, 1), jnp.float32),   # teacher running row max
            pltpu.VMEM((T, 1), jnp.float32),   # teacher running sum-exp
            pltpu.VMEM((S, 1), jnp.float32),   # student running row max
            pltpu.VMEM((S, 1), jnp.float32),   # student running sum-exp
        ],
        input_output_aliases={3: 1},           # center buffer -> new_center
        compiler_params=pltpu.CompilerParams(
            dimension_semantics=("arbitrary",),      # D axis carries reductions
            vmem_limit_bytes=vmem_limit),
    )(inv_temp_arr, student_output, teacher_output, center)
    return loss[0, 0], new_center


class DINOLossPallas:
    """Functional port of DINOLoss; center buffer kept as a JAX array."""

    def __init__(self, out_dim, warmup_teacher_temp, teacher_temp,
                 warmup_teacher_temp_epochs, nepochs, student_temp=0.1,
                 center_momentum=0.9):
        self.student_temp = student_temp
        self.center_momentum = center_momentum
        self.center = jnp.zeros((1, out_dim), jnp.float32)   # deterministic init
        self.teacher_temp_schedule = np.concatenate((
            np.linspace(warmup_teacher_temp, teacher_temp,
                        warmup_teacher_temp_epochs),
            np.ones(nepochs - warmup_teacher_temp_epochs) * teacher_temp,
        ))

    def __call__(self, student_output, teacher_output, epoch):
        temp = float(self.teacher_temp_schedule[epoch])
        loss, new_center = dino_loss_pallas(
            student_output, teacher_output, self.center, temp,
            student_temp=self.student_temp,
            center_momentum=self.center_momentum)
        # TODO(synk): distributed DINO all-reduces the teacher batch mean for the
        # center update; this single-host variant uses the local batch only.
        self.center = new_center
        return loss


def _reference_loss(student_output, teacher_output, center, temp,
                    student_temp=0.1):
    """Literal (loop-for-loop) pure-JAX reimplementation of the PyTorch code."""
    s = student_output.astype(jnp.float32) / student_temp
    logits = (teacher_output.astype(jnp.float32) - center) / temp
    p = jax.nn.softmax(logits, axis=-1)
    half = teacher_output.shape[0] // 2
    chunks = [p[:half], p[half:]]
    ls = jax.nn.log_softmax(s, axis=-1)
    total = 0.0
    n = 0
    for iq, q in enumerate(chunks):
        for v in range(s.shape[0]):
            if v == iq:
                continue
            total += jnp.mean(jnp.sum(-q * ls[v], axis=-1))
            n += 1
    return total / n


if __name__ == "__main__":
    key = jax.random.PRNGKey(0)
    k1, k2 = jax.random.split(key)
    S, T, D = 16, 8, 2048          # student rows, teacher rows, out_dim
    student = jax.random.normal(k1, (S, D), jnp.float32).astype(jnp.bfloat16)
    teacher = jax.random.normal(k2, (T, D), jnp.float32).astype(jnp.bfloat16)

    module = DINOLossPallas(out_dim=D, warmup_teacher_temp=0.04,
                            teacher_temp=0.07, warmup_teacher_temp_epochs=5,
                            nepochs=10)
    old_center = module.center
    epoch = 2

    loss = module(student, teacher, epoch)        # fast (fused) path
    jax.block_until_ready(loss)
    jax.block_until_ready(module.center)

    # Reference values (same bf16 inputs).
    temp = float(module.teacher_temp_schedule[epoch])
    ref_loss = float(_reference_loss(student, teacher, old_center, temp))
    ref_center = (old_center * 0.9
                  + (jnp.sum(teacher.astype(jnp.float32), axis=0,
                             keepdims=True) / T) * 0.1)
    tol = 2e-3 * max(1.0, abs(ref_loss))
    assert abs(float(loss) - ref_loss) < tol, (float(loss), ref_loss)
    assert float(jnp.max(jnp.abs(module.center - ref_center))) < 1e-5

    # Also exercise the streaming (out_dim-tiled) path explicitly.
    loss_t, center_t = dino_loss_pallas(student, teacher, old_center, temp,
                                        block_d=512, force_tiled=True)
    jax.block_until_ready(loss_t)
    jax.block_until_ready(center_t)
    assert abs(float(loss_t) - ref_loss) < tol, (float(loss_t), ref_loss)
    assert float(jnp.max(jnp.abs(center_t - ref_center))) < 1e-5

    print("KERNEL_OK")
</pallas_src>

<mosaic_0001>
module attributes {stable_mosaic.version = 11 : i64} {
  func.func @_dino_loss_fused_kernel(%arg0: i32, %arg1: memref<1xf32, #tpu.memory_space<smem>>, %arg2: memref<16x2048xbf16, #tpu.memory_space<vmem>>, %arg3: memref<8x2048xbf16, #tpu.memory_space<vmem>>, %arg4: memref<1x2048xf32, #tpu.memory_space<vmem>>, %arg5: memref<1x1xf32, #tpu.memory_space<vmem>>, %arg6: memref<1x2048xf32, #tpu.memory_space<vmem>>) attributes {dimension_semantics = [#tpu.dimension_semantics<arbitrary>], iteration_bounds = array<i64: 1>, scalar_prefetch = 0 : i64, scratch_operands = 0 : i64, tpu.core_type = #tpu.core_type<tc>, window_params = [{transform_indices = @transform_0, window_bounds = array<i64: 1>}, {pipeline_mode = #tpu.pipeline_mode<synchronous>, transform_indices = @transform_1, window_bounds = array<i64: 16, 2048>}, {pipeline_mode = #tpu.pipeline_mode<synchronous>, transform_indices = @transform_2, window_bounds = array<i64: 8, 2048>}, {pipeline_mode = #tpu.pipeline_mode<synchronous>, transform_indices = @transform_3, window_bounds = array<i64: 1, 2048>}, {pipeline_mode = #tpu.pipeline_mode<synchronous>, transform_indices = @transform_4, window_bounds = array<i64: 1, 1>}, {pipeline_mode = #tpu.pipeline_mode<synchronous>, transform_indices = @transform_5, window_bounds = array<i64: 1, 2048>}]} {
    %c0 = arith.constant 0 : index
    %0 = memref.load %arg1[%c0] : memref<1xf32, #tpu.memory_space<smem>>
    %c0_0 = arith.constant 0 : index
    %c0_1 = arith.constant 0 : index
    %1 = vector.load %arg3[%c0_0, %c0_1] : memref<8x2048xbf16, #tpu.memory_space<vmem>>, vector<8x2048xbf16>
    %c0_2 = arith.constant 0 : index
    %c0_3 = arith.constant 0 : index
    %2 = vector.load %arg2[%c0_2, %c0_3] : memref<16x2048xbf16, #tpu.memory_space<vmem>>, vector<16x2048xbf16>
    %c0_4 = arith.constant 0 : index
    %c0_5 = arith.constant 0 : index
    %3 = vector.load %arg4[%c0_4, %c0_5] : memref<1x2048xf32, #tpu.memory_space<vmem>>, vector<1x2048xf32>
    %4 = arith.extf %1 : vector<8x2048xbf16> to vector<8x2048xf32>
    %5 = vector.broadcast %3 : vector<1x2048xf32> to vector<8x2048xf32>
    %6 = arith.subf %4, %5 : vector<8x2048xf32>
    %7 = vector.broadcast %0 : f32 to vector<8x2048xf32>
    %8 = arith.mulf %6, %7 : vector<8x2048xf32>
    %cst = arith.constant dense<0xFF800000> : vector<8xf32>
    %9 = vector.multi_reduction <maximumf>, %8, %cst [1] : vector<8x2048xf32> to vector<8xf32>
    %10 = vector.shape_cast %9 : vector<8xf32> to vector<8x1xf32>
    %11 = vector.broadcast %10 : vector<8x1xf32> to vector<8x2048xf32>
    %12 = arith.subf %8, %11 : vector<8x2048xf32>
    %13 = math.exp %12 : vector<8x2048xf32>
    %cst_6 = arith.constant dense<0.000000e+00> : vector<8xf32>
    %14 = vector.multi_reduction <add>, %13, %cst_6 [1] : vector<8x2048xf32> to vector<8xf32>
    %15 = vector.shape_cast %14 : vector<8xf32> to vector<8x1xf32>
    %16 = arith.truncf %13 : vector<8x2048xf32> to vector<8x2048xbf16>
    %cst_7 = arith.constant dense<0.000000e+00> : vector<8x16xf32>
    %17 = tpu.matmul %16, %2, %cst_7 {dimension_numbers = #tpu.dot_dimension_numbers<[1], [1], [0], [0], [0, 0, 1, 0], [], []>} : vector<8x2048xbf16>, vector<16x2048xbf16>, vector<8x16xf32> -> vector<8x16xf32>
    %18 = tpu.reciprocal %15 : vector<8x1xf32> -> vector<8x1xf32>
    %19 = vector.broadcast %18 : vector<8x1xf32> to vector<8x16xf32>
    %20 = arith.mulf %17, %19 : vector<8x16xf32>
    %21 = arith.extf %2 : vector<16x2048xbf16> to vector<16x2048xf32>
    %cst_8 = arith.constant 1.000000e+01 : f32
    %22 = vector.broadcast %cst_8 : f32 to vector<16x2048xf32>
    %23 = arith.mulf %21, %22 : vector<16x2048xf32>
    %cst_9 = arith.constant dense<0xFF800000> : vector<16xf32>
    %24 = vector.multi_reduction <maximumf>, %23, %cst_9 [1] : vector<16x2048xf32> to vector<16xf32>
    %25 = vector.shape_cast %24 : vector<16xf32> to vector<16x1xf32>
    %26 = vector.broadcast %25 : vector<16x1xf32> to vector<16x2048xf32>
    %27 = arith.subf %23, %26 : vector<16x2048xf32>
    %28 = math.exp %27 : vector<16x2048xf32>
    %cst_10 = arith.constant dense<0.000000e+00> : vector<16xf32>
    %29 = vector.multi_reduction <add>, %28, %cst_10 [1] : vector<16x2048xf32> to vector<16xf32>
    %30 = vector.shape_cast %29 : vector<16xf32> to vector<16x1xf32>
    %31 = math.log %30 : vector<16x1xf32>
    %32 = arith.addf %25, %31 : vector<16x1xf32>
    %33 = tpu.iota {dimensions = array<i32: 0>} : vector<8x16xi32>
    %34 = tpu.iota {dimensions = array<i32: 1>} : vector<8x16xi32>
    %c4_i32 = arith.constant 4 : i32
    %35 = vector.broadcast %c4_i32 : i32 to vector<8x16xi32>
    %36 = arith.cmpi slt, %33, %35 : vector<8x16xi32>
    %c0_i32 = arith.constant 0 : i32
    %c1_i32 = arith.constant 1 : i32
    %37 = vector.broadcast %c0_i32 : i32 to vector<8x16xi32>
    %38 = vector.broadcast %c1_i32 : i32 to vector<8x16xi32>
    %39 = arith.select %36, %37, %38 : vector<8x16xi1>, vector<8x16xi32>
    %40 = arith.cmpi ne, %34, %39 : vector<8x16xi32>
    %cst_11 = arith.constant 0.000000e+00 : f32
    %41 = vector.broadcast %cst_11 : f32 to vector<8x16xf32>
    %42 = arith.select %40, %20, %41 : vector<8x16xi1>, vector<8x16xf32>
    %43 = vector.shape_cast %42 : vector<8x16xf32> to vector<1x8x16xf32>
    %cst_12 = arith.constant dense<0.000000e+00> : vector<1xf32>
    %44 = vector.multi_reduction <add>, %43, %cst_12 [1, 2] : vector<1x8x16xf32> to vector<1xf32>
    %45 = vector.shape_cast %44 : vector<1xf32> to vector<1x1x1xf32>
    %46 = vector.extract %45[0, 0, 0] : f32 from vector<1x1x1xf32>
    %47 = vector.broadcast %46 : f32 to vector<1x1xf32>
    %cst_13 = arith.constant 2.500000e+00 : f32
    %48 = vector.broadcast %cst_13 : f32 to vector<1x1xf32>
    %49 = arith.mulf %47, %48 : vector<1x1xf32>
    %50 = tpu.iota {dimensions = array<i32: 0>} : vector<16x1xi32>
    %c2_i32 = arith.constant 2 : i32
    %51 = vector.broadcast %c2_i32 : i32 to vector<16x1xi32>
    %52 = arith.cmpi slt, %50, %51 : vector<16x1xi32>
    %cst_14 = arith.constant 1.000000e+00 : f32
    %cst_15 = arith.constant 2.000000e+00 : f32
    %53 = vector.broadcast %cst_14 : f32 to vector<16x1xf32>
    %54 = vector.broadcast %cst_15 : f32 to vector<16x1xf32>
    %55 = arith.select %52, %53, %54 : vector<16x1xi1>, vector<16x1xf32>
    %56 = arith.mulf %55, %32 : vector<16x1xf32>
    %57 = vector.shape_cast %56 : vector<16x1xf32> to vector<1x16x1xf32>
    %cst_16 = arith.constant dense<0.000000e+00> : vector<1xf32>
    %58 = vector.multi_reduction <add>, %57, %cst_16 [1, 2] : vector<1x16x1xf32> to vector<1xf32>
    %59 = vector.shape_cast %58 : vector<1xf32> to vector<1x1x1xf32>
    %60 = vector.extract %59[0, 0, 0] : f32 from vector<1x1x1xf32>
    %61 = vector.broadcast %60 : f32 to vector<1x1xf32>
    %62 = arith.subf %61, %49 : vector<1x1xf32>
    %cst_17 = arith.constant 0.0333333351 : f32
    %63 = vector.broadcast %cst_17 : f32 to vector<1x1xf32>
    %64 = arith.mulf %62, %63 : vector<1x1xf32>
    %c0_18 = arith.constant 0 : index
    %c0_19 = arith.constant 0 : index
    %65 = vector.load %arg5[%c0_18, %c0_19] : memref<1x1xf32, #tpu.memory_space<vmem>>, vector<1x1xf32>
    tpu.vector_store %arg5[%c0_18, %c0_19], %64 {strides = array<i32>} : memref<1x1xf32, #tpu.memory_space<vmem>>, vector<1x1xf32>,
    %66 = arith.extf %1 : vector<8x2048xbf16> to vector<8x2048xf32>
    %cst_20 = arith.constant dense<0.000000e+00> : vector<2048xf32>
    %67 = vector.multi_reduction <add>, %66, %cst_20 [0] : vector<8x2048xf32> to vector<2048xf32>
    %68 = vector.shape_cast %67 : vector<2048xf32> to vector<1x2048xf32>
    %cst_21 = arith.constant 0.899999976 : f32
    %69 = vector.broadcast %cst_21 : f32 to vector<1x2048xf32>
    %70 = arith.mulf %3, %69 : vector<1x2048xf32>
    %cst_22 = arith.constant 1.250000e-02 : f32
    %71 = vector.broadcast %cst_22 : f32 to vector<1x2048xf32>
    %72 = arith.mulf %68, %71 : vector<1x2048xf32>
    %73 = arith.addf %70, %72 : vector<1x2048xf32>
    %c0_23 = arith.constant 0 : index
    %c0_24 = arith.constant 0 : index
    %74 = vector.load %arg6[%c0_23, %c0_24] : memref<1x2048xf32, #tpu.memory_space<vmem>>, vector<1x2048xf32>
    tpu.vector_store %arg6[%c0_23, %c0_24], %73 {strides = array<i32>} : memref<1x2048xf32, #tpu.memory_space<vmem>>, vector<1x2048xf32>,
    return
  }
  func.func @transform_0(%arg0: i32) -> i32 {
    %c0_i32 = arith.constant 0 : i32
    %c0_i32_0 = arith.constant 0 : i32
    return %c0_i32 : i32
  }
  func.func @transform_1(%arg0: i32) -> (i32, i32) {
    %c0_i32 = arith.constant 0 : i32
    %c0_i32_0 = arith.constant 0 : i32
    %c0_i32_1 = arith.constant 0 : i32
    return %c0_i32, %c0_i32_0 : i32, i32
  }
  func.func @transform_2(%arg0: i32) -> (i32, i32) {
    %c0_i32 = arith.constant 0 : i32
    %c0_i32_0 = arith.constant 0 : i32
    %c0_i32_1 = arith.constant 0 : i32
    return %c0_i32, %c0_i32_0 : i32, i32
  }
  func.func @transform_3(%arg0: i32) -> (i32, i32) {
    %c0_i32 = arith.constant 0 : i32
    %c0_i32_0 = arith.constant 0 : i32
    %c0_i32_1 = arith.constant 0 : i32
    return %c0_i32, %c0_i32_0 : i32, i32
  }
  func.func @transform_4(%arg0: i32) -> (i32, i32) {
    %c0_i32 = arith.constant 0 : i32
    %c0_i32_0 = arith.constant 0 : i32
    %c0_i32_1 = arith.constant 0 : i32
    return %c0_i32, %c0_i32_0 : i32, i32
  }
  func.func @transform_5(%arg0: i32) -> (i32, i32) {
    %c0_i32 = arith.constant 0 : i32
    %c0_i32_0 = arith.constant 0 : i32
    %c0_i32_1 = arith.constant 0 : i32
    return %c0_i32, %c0_i32_0 : i32, i32
  }
}

</mosaic_0001>

<llo_original>
// kernel: tpu_custom_call.1
$region0: #{tpu_custom_call.1}
  #allocation0 [shape = 'u32[]', space=smem, size = 0x4, offset = 0x4, fixed_abs, tag = 'smem constant byte address 0x4 - core index']
  #allocation1 [shape = 'u32[144,128]{1,0:T(1,128)}', space=vmem, size = 0x12000, scoped, tag = 'internal scratch']
  #allocation2 [shape = 'f32[1]{0:T(128)S(6)}', space=smem, size = 0x200, scoped, tag = 'scoped memory for tpu_custom_call.1']
  %s0 = inlined_call_operand.<no memory space> [shape: f32[1], index: 0, kind: input, shape index: {}]
  %s1 = inlined_call_operand.hbm [shape: bf16[16,2048], index: 1, kind: input, shape index: {}]
  %s2 = inlined_call_operand.hbm [shape: bf16[8,2048], index: 2, kind: input, shape index: {}]
  %s3 = inlined_call_operand.hbm [shape: f32[1,2048], index: 3, kind: input, shape index: {}, may-alias: {3,5}]
  %s4 = inlined_call_operand.hbm [shape: f32[1,1], index: 4, kind: output, shape index: {0}]
  %s5 = inlined_call_operand.hbm [shape: f32[1,2048], index: 5, kind: output, shape index: {1}, may-alias: {3,5}]
  %6 = xla_tuple %s4, %s5
  %s7 = sld [smem:[#allocation0]]
  $region46: #{tpu_custom_call.1} parent=0
    _
  %s9 = ssub.s32 1, %s7
  %s10 = scalar_select 0, %s9, %s7
  %11 = sst [smem:[#allocation2]] %s0
  $region1: #{tpu_custom_call.1} parent=0
    #allocation3 [shape = 'u8[65536]{0}', space=vmem, size = 0x10000, scoped, tag = 'input window, operand 1, single buffered']
    #allocation4 [shape = 's32[1]{0}', space=sflag, size = 0x4, scoped, tag = 'scoped memory for tpu_custom_call.1']
    #allocation5 [shape = 's32[1]{0}', space=sflag, size = 0x4, scoped, tag = 'scoped memory for tpu_custom_call.1']
    #allocation6 [shape = 'u8[32768]{0}', space=vmem, size = 0x8000, scoped, tag = 'input window, operand 2, single buffered']
    #allocation7 [shape = 's32[1]{0}', space=sflag, size = 0x4, scoped, tag = 'scoped memory for tpu_custom_call.1']
    #allocation8 [shape = 'u8[8192]{0}', space=vmem, size = 0x2000, scoped, tag = 'input window, operand 3, single buffered']
    #allocation9 [shape = 'u8[512]{0}', space=vmem, size = 0x400, scoped, tag = 'output window, operand 0, single buffered']
    #allocation10 [shape = 'u8[8192]{0}', space=vmem, size = 0x2000, scoped, tag = 'output window, operand 1, single buffered']
    #allocation11 [shape = 's32[1]{0}', space=sflag, size = 0x4, scoped, tag = 'scoped memory for tpu_custom_call.1']
    %12 = vsyncpa [#allocation4], 0
    %13 = vsyncpa [#allocation7], 0
    %14 = vsyncpa [#allocation5], 0
    %15 = vsyncpa [#allocation11], 0
    // Predicated region
    $region2: #{tpu_custom_call.1} parent=1 // pred_check
      _
    $region3: #{tpu_custom_call.1} parent=1 // pred_check_branch
      %17 = sbr.rel (0) target = $region5
    $region4: #{tpu_custom_call.1} parent=1 // pred_region
      _
    $region5: #{tpu_custom_call.1} parent=1 // pred_fallthru
      _
    // Predicated region
    $region6: #{tpu_custom_call.1} parent=1 // pred_check
      _
    $region7: #{tpu_custom_call.1} parent=1 // pred_check_branch
      %19 = sbr.rel (0) target = $region9
    $region8: #{tpu_custom_call.1} parent=1 // pred_region
      %s21 = ssub.s32 2048, 2048
      %22 = vsyncadd [#allocation4], %s21
      %s23 = sshll.u32 [#allocation3], 4
      %s24 = int_to_ptr.vmem [resolvable:$true] %s23
      %29 = dma.hbm_to_vmem [thread:$0]  %s1, 2048, %s24, [#allocation4], 1024, 1024, 64
    $region9: #{tpu_custom_call.1} parent=1 // pred_fallthru
      _
    // Predicated region
    $region10: #{tpu_custom_call.1} parent=1 // pred_check
      _
    $region11: #{tpu_custom_call.1} parent=1 // pred_check_branch
      %31 = sbr.rel (0) target = $region13
    $region12: #{tpu_custom_call.1} parent=1 // pred_region
      %s33 = ssub.s32 1024, 1024
      %34 = vsyncadd [#allocation7], %s33
      %s36 = sshll.u32 [#allocation6], 4
      %s37 = int_to_ptr.vmem [resolvable:$true] %s36
      %39 = dma.hbm_to_vmem [thread:$0]  %s2, 1024, %s37, [#allocation7]
    $region13: #{tpu_custom_call.1} parent=1 // pred_fallthru
      _
    // Predicated region
    $region14: #{tpu_custom_call.1} parent=1 // pred_check
      _
    $region15: #{tpu_custom_call.1} parent=1 // pred_check_branch
      %41 = sbr.rel (0) target = $region17
    $region16: #{tpu_custom_call.1} parent=1 // pred_region
      %s43 = ssub.s32 256, 256
      %44 = vsyncadd [#allocation7], %s43
      %s46 = sshll.u32 [#allocation8], 4
      %s47 = int_to_ptr.vmem [resolvable:$true] %s46
      %49 = dma.hbm_to_vmem [thread:$0]  %s3, 256, %s47, [#allocation7]
    $region17: #{tpu_custom_call.1} parent=1 // pred_fallthru
      _
    // Predicated region
    $region18: #{tpu_custom_call.1} parent=1 // pred_check
      _
    $region19: #{tpu_custom_call.1} parent=1 // pred_check_branch
      %51 = sbr.rel (0) target = $region21
    $region20: #{tpu_custom_call.1} parent=1 // pred_region
      %52 = dma.done [#allocation4], 2048
    $region21: #{tpu_custom_call.1} parent=1 // pred_fallthru
      _
    // Predicated region
    $region22: #{tpu_custom_call.1} parent=1 // pred_check
      _
    $region23: #{tpu_custom_call.1} parent=1 // pred_check_branch
      %54 = sbr.rel (0) target = $region25
    $region24: #{tpu_custom_call.1} parent=1 // pred_region
      %55 = dma.done [#allocation7], 1024
    $region25: #{tpu_custom_call.1} parent=1 // pred_fallthru
      _
    // Predicated region
    $region26: #{tpu_custom_call.1} parent=1 // pred_check
      _
    $region27: #{tpu_custom_call.1} parent=1 // pred_check_branch
      %57 = sbr.rel (0) target = $region29
    $region28: #{tpu_custom_call.1} parent=1 // pred_region
      %58 = dma.done [#allocation7], 256
    $region29: #{tpu_custom_call.1} parent=1 // pred_fallthru
      _
    %s60 = sld [smem:[#allocation2]]
    %v61 = vld [vmem:[#allocation6] sm:$0xff]
    %v62 = vld [vmem:[#allocation6 + $0x8] sm:$0xff]
    %v63 = vld [vmem:[#allocation6 + $0x10] sm:$0xff]
    %v64 = vld [vmem:[#allocation6 + $0x18] sm:$0xff]
    %v65 = vld [vmem:[#allocation6 + $0x20] sm:$0xff]
    %v66 = vld [vmem:[#allocation6 + $0x28] sm:$0xff]
    %v67 = vld [vmem:[#allocation6 + $0x30] sm:$0xff]
    %v68 = vld [vmem:[#allocation6 + $0x38] sm:$0xff]
    %v69 = vld [vmem:[#allocation3] sm:$0xff]
    %v70 = vld [vmem:[#allocation3 + $0x8] sm:$0xff]
    %v71 = vld [vmem:[#allocation3 + $0x10] sm:$0xff]
    %v72 = vld [vmem:[#allocation3 + $0x18] sm:$0xff]
    %v73 = vld [vmem:[#allocation3 + $0x20] sm:$0xff]
    %v74 = vld [vmem:[#allocation3 + $0x28] sm:$0xff]
    %v75 = vld [vmem:[#allocation3 + $0x30] sm:$0xff]
    %v76 = vld [vmem:[#allocation3 + $0x38] sm:$0xff]
    %v77 = vld [vmem:[#allocation3 + $0x40] sm:$0xff]
    %v78 = vld [vmem:[#allocation3 + $0x48] sm:$0xff]
    %v79 = vld [vmem:[#allocation3 + $0x50] sm:$0xff]
    %v80 = vld [vmem:[#allocation3 + $0x58] sm:$0xff]
    %v81 = vld [vmem:[#allocation3 + $0x60] sm:$0xff]
    %v82 = vld [vmem:[#allocation3 + $0x68] sm:$0xff]
    %v83 = vld [vmem:[#allocation3 + $0x70] sm:$0xff]
    %v84 = vld [vmem:[#allocation3 + $0x78] sm:$0xff]
    %v85 = vld [vmem:[#allocation8] sm:$0xff]
    %v86 = vld [vmem:[#allocation8 + $0x8] sm:$0xff]
    %v87 = vunpack.c.l.bf16 %v61
    %v88 = vunpack.c.h.bf16 %v61
    %v89 = vunpack.c.l.bf16 %v62
    %v90 = vunpack.c.h.bf16 %v62
    %v91 = vunpack.c.l.bf16 %v63
    %v92 = vunpack.c.h.bf16 %v63
    %v93 = vunpack.c.l.bf16 %v64
    %v94 = vunpack.c.h.bf16 %v64
    %v95 = vunpack.c.l.bf16 %v65
    %v96 = vunpack.c.h.bf16 %v65
    %v97 = vunpack.c.l.bf16 %v66
    %v98 = vunpack.c.h.bf16 %v66
    %v99 = vunpack.c.l.bf16 %v67
    %v100 = vunpack.c.h.bf16 %v67
    %v101 = vunpack.c.l.bf16 %v68
    %v102 = vunpack.c.h.bf16 %v68
    %v105 = vlaneseq
    %v106 = vshrl.u32 %v105, 7
    %v107 = vsub.s32 0, %v106
    %v108 = vrot.slane %v85, %v107
    %v109 = vlaneseq
    %v110 = vshrl.u32 %v109, 7
    %v111 = vsub.s32 1, %v110
    %v112 = vrot.slane %v85, %v111
    %v113 = vlaneseq
    %v114 = vshrl.u32 %v113, 7
    %v115 = vsub.s32 2, %v114
    %v116 = vrot.slane %v85, %v115
    %v117 = vlaneseq
    %v118 = vshrl.u32 %v117, 7
    %v119 = vsub.s32 3, %v118
    %v120 = vrot.slane %v85, %v119
    %v121 = vlaneseq
    %v122 = vshrl.u32 %v121, 7
    %v123 = vsub.s32 4, %v122
    %v124 = vrot.slane %v85, %v123
    %v125 = vlaneseq
    %v126 = vshrl.u32 %v125, 7
    %v127 = vsub.s32 5, %v126
    %v128 = vrot.slane %v85, %v127
    %v129 = vlaneseq
    %v130 = vshrl.u32 %v129, 7
    %v131 = vsub.s32 6, %v130
    %v132 = vrot.slane %v85, %v131
    %v133 = vlaneseq
    %v134 = vshrl.u32 %v133, 7
    %v135 = vsub.s32 7, %v134
    %v136 = vrot.slane %v85, %v135
    %v137 = vlaneseq
    %v138 = vshrl.u32 %v137, 7
    %v139 = vsub.s32 0, %v138
    %v140 = vrot.slane %v86, %v139
    %v141 = vlaneseq
    %v142 = vshrl.u32 %v141, 7
    %v143 = vsub.s32 1, %v142
    %v144 = vrot.slane %v86, %v143
    %v145 = vlaneseq
    %v146 = vshrl.u32 %v145, 7
    %v147 = vsub.s32 2, %v146
    %v148 = vrot.slane %v86, %v147
    %v149 = vlaneseq
    %v150 = vshrl.u32 %v149, 7
    %v151 = vsub.s32 3, %v150
    %v152 = vrot.slane %v86, %v151
    %v153 = vlaneseq
    %v154 = vshrl.u32 %v153, 7
    %v155 = vsub.s32 4, %v154
    %v156 = vrot.slane %v86, %v155
    %v157 = vlaneseq
    %v158 = vshrl.u32 %v157, 7
    %v159 = vsub.s32 5, %v158
    %v160 = vrot.slane %v86, %v159
    %v161 = vlaneseq
    %v162 = vshrl.u32 %v161, 7
    %v163 = vsub.s32 6, %v162
    %v164 = vrot.slane %v86, %v163
    %v165 = vlaneseq
    %v166 = vshrl.u32 %v165, 7
    %v167 = vsub.s32 7, %v166
    %v168 = vrot.slane %v86, %v167
    %v185 = vsub.f32 %v87, %v108
    %v186 = vsub.f32 %v88, %v112
    %v187 = vsub.f32 %v89, %v116
    %v188 = vsub.f32 %v90, %v120
    %v189 = vsub.f32 %v91, %v124
    %v190 = vsub.f32 %v92, %v128
    %v191 = vsub.f32 %v93, %v132
    %v192 = vsub.f32 %v94, %v136
    %v193 = vsub.f32 %v95, %v140
    %v194 = vsub.f32 %v96, %v144
    %v195 = vsub.f32 %v97, %v148
    %v196 = vsub.f32 %v98, %v152
    %v197 = vsub.f32 %v99, %v156
    %v198 = vsub.f32 %v100, %v160
    %v199 = vsub.f32 %v101, %v164
    %v200 = vsub.f32 %v102, %v168
    %v201 = vstv %s60
    %v202 = vmul.f32 %v185, %v201
    %v203 = vmul.f32 %v186, %v201
    %v204 = vmul.f32 %v187, %v201
    %v205 = vmul.f32 %v188, %v201
    %v206 = vmul.f32 %v189, %v201
    %v207 = vmul.f32 %v190, %v201
    %v208 = vmul.f32 %v191, %v201
    %v209 = vmul.f32 %v192, %v201
    %v210 = vmul.f32 %v193, %v201
    %v211 = vmul.f32 %v194, %v201
    %v212 = vmul.f32 %v195, %v201
    %v213 = vmul.f32 %v196, %v201
    %v214 = vmul.f32 %v197, %v201
    %v215 = vmul.f32 %v198, %v201
    %v216 = vmul.f32 %v199, %v201
    %v217 = vmul.f32 %v200, %v201
    %v218 = vmax.f32 %v202, %v206
    %v219 = vmax.f32 %v203, %v207
    %v220 = vmax.f32 %v204, %v208
    %v221 = vmax.f32 %v205, %v209
    %v222 = vmax.f32 %v218, %v210
    %v223 = vmax.f32 %v219, %v211
    %v224 = vmax.f32 %v220, %v212
    %v225 = vmax.f32 %v221, %v213
    %v226 = vmax.f32 %v222, %v214
    %v227 = vmax.f32 %v223, %v215
    %v228 = vmax.f32 %v224, %v216
    %v229 = vmax.f32 %v225, %v217
    %v230 = vmax.f32 %v226, %v227
    %v231 = vmax.f32 %v228, %v229
    %v232 = vmax.f32 %v230, %v231
    %233 = vmax.xlane.f32.xlu0 %v232
    %v234 = vpop.xlane.xlu0 %233
    %v235 = vsub.f32 %v202, %v234
    %v236 = vsub.f32 %v203, %v234
    %v237 = vsub.f32 %v204, %v234
    %v238 = vsub.f32 %v205, %v234
    %v239 = vsub.f32 %v206, %v234
    %v240 = vsub.f32 %v207, %v234
    %v241 = vsub.f32 %v208, %v234
    %v242 = vsub.f32 %v209, %v234
    %v243 = vsub.f32 %v210, %v234
    %v244 = vsub.f32 %v211, %v234
    %v245 = vsub.f32 %v212, %v234
    %v246 = vsub.f32 %v213, %v234
    %v247 = vsub.f32 %v214, %v234
    %v248 = vsub.f32 %v215, %v234
    %v249 = vsub.f32 %v216, %v234
    %v250 = vsub.f32 %v217, %v234
    %v251 = vmul.f32 %v235, 1.442695
    %v252 = vpow.pop %v251
    %v253 = vmul.f32 %v236, 1.442695
    %v254 = vpow.pop %v253
    %v255 = vmul.f32 %v237, 1.442695
    %v256 = vpow.pop %v255
    %v257 = vmul.f32 %v238, 1.442695
    %v258 = vpow.pop %v257
    %v259 = vmul.f32 %v239, 1.442695
    %v260 = vpow.pop %v259
    %v261 = vmul.f32 %v240, 1.442695
    %v262 = vpow.pop %v261
    %v263 = vmul.f32 %v241, 1.442695
    %v264 = vpow.pop %v263
    %v265 = vmul.f32 %v242, 1.442695
    %v266 = vpow.pop %v265
    %v267 = vmul.f32 %v243, 1.442695
    %v268 = vpow.pop %v267
    %v269 = vmul.f32 %v244, 1.442695
    %v270 = vpow.pop %v269
    %v271 = vmul.f32 %v245, 1.442695
    %v272 = vpow.pop %v271
    %v273 = vmul.f32 %v246, 1.442695
    %v274 = vpow.pop %v273
    %v275 = vmul.f32 %v247, 1.442695
    %v276 = vpow.pop %v275
    %v277 = vmul.f32 %v248, 1.442695
    %v278 = vpow.pop %v277
    %v279 = vmul.f32 %v249, 1.442695
    %v280 = vpow.pop %v279
    %v281 = vmul.f32 %v250, 1.442695
    %v282 = vpow.pop %v281
    %v283 = vadd.f32 %v252, %v254
    %v284 = vadd.f32 %v283, %v256
    %v285 = vadd.f32 %v284, %v258
    %v286 = vadd.f32 %v285, %v260
    %v287 = vadd.f32 %v286, %v262
    %v288 = vadd.f32 %v287, %v264
    %v289 = vadd.f32 %v288, %v266
    %v290 = vadd.f32 %v289, %v268
    %v291 = vadd.f32 %v290, %v270
    %v292 = vadd.f32 %v291, %v272
    %v293 = vadd.f32 %v292, %v274
    %v294 = vadd.f32 %v293, %v276
    %v295 = vadd.f32 %v294, %v278
    %v296 = vadd.f32 %v295, %v280
    %v297 = vadd.f32 %v296, %v282
    %298 = vadd.xlane.f32.xlu0 %v297
    %v299 = vpop.xlane.xlu0 %298
    %v300 = vpack.c.bf16 %v252, %v252
    %v301 = vpack.c.bf16 %v254, %v254
    %v302 = vpack.c.bf16 %v256, %v256
    %v303 = vpack.c.bf16 %v258, %v258
    %v304 = vpack.c.bf16 %v260, %v260
    %v305 = vpack.c.bf16 %v262, %v262
    %v306 = vpack.c.bf16 %v264, %v264
    %v307 = vpack.c.bf16 %v266, %v266
    %v308 = vpack.c.bf16 %v268, %v268
    %v309 = vpack.c.bf16 %v270, %v270
    %v310 = vpack.c.bf16 %v272, %v272
    %v311 = vpack.c.bf16 %v274, %v274
    %v312 = vpack.c.bf16 %v276, %v276
    %v313 = vpack.c.bf16 %v278, %v278
    %v314 = vpack.c.bf16 %v280, %v280
    %v315 = vpack.c.bf16 %v282, %v282
    %v332 = vunpack.c.l.b16 %v69
    %v333 = vunpack.c.h.b16 %v69
    %v334 = vunpack.c.l.b16 %v70
    %v335 = vunpack.c.h.b16 %v70
    %v336 = vunpack.c.l.b16 %v71
    %v337 = vunpack.c.h.b16 %v71
    %v338 = vunpack.c.l.b16 %v72
    %v339 = vunpack.c.h.b16 %v72
    %v340 = vunpack.c.l.b16 %v73
    %v341 = vunpack.c.h.b16 %v73
    %v342 = vunpack.c.l.b16 %v74
    %v343 = vunpack.c.h.b16 %v74
    %v344 = vunpack.c.l.b16 %v75
    %v345 = vunpack.c.h.b16 %v75
    %v346 = vunpack.c.l.b16 %v76
    %v347 = vunpack.c.h.b16 %v76
    %v348 = vunpack.c.l.b16 %v77
    %v349 = vunpack.c.h.b16 %v77
    %v350 = vunpack.c.l.b16 %v78
    %v351 = vunpack.c.h.b16 %v78
    %v352 = vunpack.c.l.b16 %v79
    %v353 = vunpack.c.h.b16 %v79
    %v354 = vunpack.c.l.b16 %v80
    %v355 = vunpack.c.h.b16 %v80
    %v356 = vunpack.c.l.b16 %v81
    %v357 = vunpack.c.h.b16 %v81
    %v358 = vunpack.c.l.b16 %v82
    %v359 = vunpack.c.h.b16 %v82
    %v360 = vunpack.c.l.b16 %v83
    %v361 = vunpack.c.h.b16 %v83
    %v362 = vunpack.c.l.b16 %v84
    %v363 = vunpack.c.h.b16 %v84
    %v364 = vpack.c.b16 %v348, %v332
    %v365 = vpack.c.b16 %v349, %v333
    %v366 = vpack.c.b16 %v350, %v334
    %v367 = vpack.c.b16 %v351, %v335
    %v368 = vpack.c.b16 %v352, %v336
    %v369 = vpack.c.b16 %v353, %v337
    %v370 = vpack.c.b16 %v354, %v338
    %v371 = vpack.c.b16 %v355, %v339
    %v372 = vpack.c.b16 %v356, %v340
    %v373 = vpack.c.b16 %v357, %v341
    %v374 = vpack.c.b16 %v358, %v342
    %v375 = vpack.c.b16 %v359, %v343
    %v376 = vpack.c.b16 %v360, %v344
    %v377 = vpack.c.b16 %v361, %v345
    %v378 = vpack.c.b16 %v362, %v346
    %v379 = vpack.c.b16 %v363, %v347
    %396 = vmatprep.subr.bf16.mxu0 %v365
    %397 = vmatpush1.bf16.xpose.msra.mxu0 %v364
    %398 = vmatprep.subr.bf16.mxu0 0
    %399 = vmatpush1.bf16.xpose.msra.mxu0 0
    %400 = vmatprep.subr.bf16.mxu0 0
    %401 = vmatpush1.bf16.xpose.msra.mxu0 0
    %402 = vmatprep.subr.bf16.mxu0 0
    %403 = vmatpush1.bf16.xpose.msra.mxu0 0
    %404 = vmatprep.subr.bf16.mxu0 0
    %405 = vmatpush1.bf16.xpose.msra.mxu0 0
    %406 = vmatprep.subr.bf16.mxu0 0
    %407 = vmatpush1.bf16.xpose.msra.mxu0 0
    %408 = vmatprep.subr.bf16.mxu0 0
    %409 = vmatpush1.bf16.xpose.msra.mxu0 0
    %410 = vmatprep.subr.bf16.mxu0 0
    %411 = vmatpush1.bf16.xpose.msra.mxu0 0
    %412 = vmatprep.subr.bf16.mxu0 0
    %413 = vmatpush1.bf16.xpose.msra.mxu0 0
    %414 = vmatprep.subr.bf16.mxu0 0
    %415 = vmatpush1.bf16.xpose.msra.mxu0 0
    %416 = vmatprep.subr.bf16.mxu0 0
    %417 = vmatpush1.bf16.xpose.msra.mxu0 0
    %418 = vmatprep.subr.bf16.mxu0 0
    %419 = vmatpush1.bf16.xpose.msra.mxu0 0
    %420 = vmatprep.subr.bf16.mxu0 0
    %421 = vmatpush1.bf16.xpose.msra.mxu0 0
    %422 = vmatprep.subr.bf16.mxu0 0
    %423 = vmatpush1.bf16.xpose.msra.mxu0 0
    %424 = vmatprep.subr.bf16.mxu0 0
    %425 = vmatpush1.bf16.xpose.msra.mxu0 0
    %426 = vmatprep.subr.bf16.mxu0 0
    %427 = vmatpush1.bf16.xpose.msra.mxu0 0
    %428 = vmatprep.mubr.bf16.mxu0 %v301
    %429 = vmatmul.mubr.bf16.gmra.mrb[0].mxu0 %v300
    %v430 = vpop.f32.mrb[0].mxu0
    %v431 = vadd.f32 0.0, %v430
    %v432 = vpop.f32.mrb[0].mxu0
    %v433 = vpop.f32.mrb[0].mxu0
    %v434 = vpop.f32.mrb[0].mxu0
    %435 = vdwg.mxu0
    %436 = vmatprep.subr.bf16.mxu0 %v367
    %437 = vmatpush1.bf16.xpose.msra.mxu0 %v366
    %438 = vmatprep.subr.bf16.mxu0 0
    %439 = vmatpush1.bf16.xpose.msra.mxu0 0
    %440 = vmatprep.subr.bf16.mxu0 0
    %441 = vmatpush1.bf16.xpose.msra.mxu0 0
    %442 = vmatprep.subr.bf16.mxu0 0
    %443 = vmatpush1.bf16.xpose.msra.mxu0 0
    %444 = vmatprep.subr.bf16.mxu0 0
    %445 = vmatpush1.bf16.xpose.msra.mxu0 0
    %446 = vmatprep.subr.bf16.mxu0 0
    %447 = vmatpush1.bf16.xpose.msra.mxu0 0
    %448 = vmatprep.subr.bf16.mxu0 0
    %449 = vmatpush1.bf16.xpose.msra.mxu0 0
    %450 = vmatprep.subr.bf16.mxu0 0
    %451 = vmatpush1.bf16.xpose.msra.mxu0 0
    %452 = vmatprep.subr.bf16.mxu0 0
    %453 = vmatpush1.bf16.xpose.msra.mxu0 0
    %454 = vmatprep.subr.bf16.mxu0 0
    %455 = vmatpush1.bf16.xpose.msra.mxu0 0
    %456 = vmatprep.subr.bf16.mxu0 0
    %457 = vmatpush1.bf16.xpose.msra.mxu0 0
    %458 = vmatprep.subr.bf16.mxu0 0
    %459 = vmatpush1.bf16.xpose.msra.mxu0 0
    %460 = vmatprep.subr.bf16.mxu0 0
    %461 = vmatpush1.bf16.xpose.msra.mxu0 0
    %462 = vmatprep.subr.bf16.mxu0 0
    %463 = vmatpush1.bf16.xpose.msra.mxu0 0
    %464 = vmatprep.subr.bf16.mxu0 0
    %465 = vmatpush1.bf16.xpose.msra.mxu0 0
    %466 = vmatprep.subr.bf16.mxu0 0
    %467 = vmatpush1.bf16.xpose.msra.mxu0 0
    %468 = vmatprep.mubr.bf16.mxu0 %v303
    %469 = vmatmul.mubr.bf16.gmra.mrb[0].mxu0 %v302
    %v470 = vpop.f32.mrb[0].mxu0
    %v471 = vadd.f32 %v431, %v470
    %v472 = vpop.f32.mrb[0].mxu0
    %v473 = vpop.f32.mrb[0].mxu0
    %v474 = vpop.f32.mrb[0].mxu0
    %475 = vdwg.mxu0
    %476 = vmatprep.subr.bf16.mxu0 %v369
    %477 = vmatpush1.bf16.xpose.msra.mxu0 %v368
    %478 = vmatprep.subr.bf16.mxu0 0
    %479 = vmatpush1.bf16.xpose.msra.mxu0 0
    %480 = vmatprep.subr.bf16.mxu0 0
    %481 = vmatpush1.bf16.xpose.msra.mxu0 0
    %482 = vmatprep.subr.bf16.mxu0 0
    %483 = vmatpush1.bf16.xpose.msra.mxu0 0
    %484 = vmatprep.subr.bf16.mxu0 0
    %485 = vmatpush1.bf16.xpose.msra.mxu0 0
    %486 = vmatprep.subr.bf16.mxu0 0
    %487 = vmatpush1.bf16.xpose.msra.mxu0 0
    %488 = vmatprep.subr.bf16.mxu0 0
    %489 = vmatpush1.bf16.xpose.msra.mxu0 0
    %490 = vmatprep.subr.bf16.mxu0 0
    %491 = vmatpush1.bf16.xpose.msra.mxu0 0
    %492 = vmatprep.subr.bf16.mxu0 0
    %493 = vmatpush1.bf16.xpose.msra.mxu0 0
    %494 = vmatprep.subr.bf16.mxu0 0
    %495 = vmatpush1.bf16.xpose.msra.mxu0 0
    %496 = vmatprep.subr.bf16.mxu0 0
    %497 = vmatpush1.bf16.xpose.msra.mxu0 0
    %498 = vmatprep.subr.bf16.mxu0 0
    %499 = vmatpush1.bf16.xpose.msra.mxu0 0
    %500 = vmatprep.subr.bf16.mxu0 0
    %501 = vmatpush1.bf16.xpose.msra.mxu0 0
    %502 = vmatprep.subr.bf16.mxu0 0
    %503 = vmatpush1.bf16.xpose.msra.mxu0 0
    %504 = vmatprep.subr.bf16.mxu0 0
    %505 = vmatpush1.bf16.xpose.msra.mxu0 0
    %506 = vmatprep.subr.bf16.mxu0 0
    %507 = vmatpush1.bf16.xpose.msra.mxu0 0
    %508 = vmatprep.mubr.bf16.mxu0 %v305
    %509 = vmatmul.mubr.bf16.gmra.mrb[0].mxu0 %v304
    %v510 = vpop.f32.mrb[0].mxu0
    %v511 = vadd.f32 %v471, %v510
    %v512 = vpop.f32.mrb[0].mxu0
    %v513 = vpop.f32.mrb[0].mxu0
    %v514 = vpop.f32.mrb[0].mxu0
    %515 = vdwg.mxu0
    %516 = vmatprep.subr.bf16.mxu0 %v371
    %517 = vmatpush1.bf16.xpose.msra.mxu0 %v370
    %518 = vmatprep.subr.bf16.mxu0 0
    %519 = vmatpush1.bf16.xpose.msra.mxu0 0
    %520 = vmatprep.subr.bf16.mxu0 0
    %521 = vmatpush1.bf16.xpose.msra.mxu0 0
    %522 = vmatprep.subr.bf16.mxu0 0
    %523 = vmatpush1.bf16.xpose.msra.mxu0 0
    %524 = vmatprep.subr.bf16.mxu0 0
    %525 = vmatpush1.bf16.xpose.msra.mxu0 0
    %526 = vmatprep.subr.bf16.mxu0 0
    %527 = vmatpush1.bf16.xpose.msra.mxu0 0
    %528 = vmatprep.subr.bf16.mxu0 0
    %529 = vmatpush1.bf16.xpose.msra.mxu0 0
    %530 = vmatprep.subr.bf16.mxu0 0
    %531 = vmatpush1.bf16.xpose.msra.mxu0 0
    %532 = vmatprep.subr.bf16.mxu0 0
    %533 = vmatpush1.bf16.xpose.msra.mxu0 0
    %534 = vmatprep.subr.bf16.mxu0 0
    %535 = vmatpush1.bf16.xpose.msra.mxu0 0
    %536 = vmatprep.subr.bf16.mxu0 0
    %537 = vmatpush1.bf16.xpose.msra.mxu0 0
    %538 = vmatprep.subr.bf16.mxu0 0
    %539 = vmatpush1.bf16.xpose.msra.mxu0 0
    %540 = vmatprep.subr.bf16.mxu0 0
    %541 = vmatpush1.bf16.xpose.msra.mxu0 0
    %542 = vmatprep.subr.bf16.mxu0 0
    %543 = vmatpush1.bf16.xpose.msra.mxu0 0
    %544 = vmatprep.subr.bf16.mxu0 0
    %545 = vmatpush1.bf16.xpose.msra.mxu0 0
    %546 = vmatprep.subr.bf16.mxu0 0
    %547 = vmatpush1.bf16.xpose.msra.mxu0 0
    %548 = vmatprep.mubr.bf16.mxu0 %v307
    %549 = vmatmul.mubr.bf16.gmra.mrb[0].mxu0 %v306
    %v550 = vpop.f32.mrb[0].mxu0
    %v551 = vadd.f32 %v511, %v550
    %v552 = vpop.f32.mrb[0].mxu0
    %v553 = vpop.f32.mrb[0].mxu0
    %v554 = vpop.f32.mrb[0].mxu0
    %555 = vdwg.mxu0
    %556 = vmatprep.subr.bf16.mxu0 %v373
    %557 = vmatpush1.bf16.xpose.msra.mxu0 %v372
    %558 = vmatprep.subr.bf16.mxu0 0
    %559 = vmatpush1.bf16.xpose.msra.mxu0 0
    %560 = vmatprep.subr.bf16.mxu0 0
    %561 = vmatpush1.bf16.xpose.msra.mxu0 0
    %562 = vmatprep.subr.bf16.mxu0 0
    %563 = vmatpush1.bf16.xpose.msra.mxu0 0
    %564 = vmatprep.subr.bf16.mxu0 0
    %565 = vmatpush1.bf16.xpose.msra.mxu0 0
    %566 = vmatprep.subr.bf16.mxu0 0
    %567 = vmatpush1.bf16.xpose.msra.mxu0 0
    %568 = vmatprep.subr.bf16.mxu0 0
    %569 = vmatpush1.bf16.xpose.msra.mxu0 0
    %570 = vmatprep.subr.bf16.mxu0 0
    %571 = vmatpush1.bf16.xpose.msra.mxu0 0
    %572 = vmatprep.subr.bf16.mxu0 0
    %573 = vmatpush1.bf16.xpose.msra.mxu0 0
    %574 = vmatprep.subr.bf16.mxu0 0
    %575 = vmatpush1.bf16.xpose.msra.mxu0 0
    %576 = vmatprep.subr.bf16.mxu0 0
    %577 = vmatpush1.bf16.xpose.msra.mxu0 0
    %578 = vmatprep.subr.bf16.mxu0 0
    %579 = vmatpush1.bf16.xpose.msra.mxu0 0
    %580 = vmatprep.subr.bf16.mxu0 0
    %581 = vmatpush1.bf16.xpose.msra.mxu0 0
    %582 = vmatprep.subr.bf16.mxu0 0
    %583 = vmatpush1.bf16.xpose.msra.mxu0 0
    %584 = vmatprep.subr.bf16.mxu0 0
    %585 = vmatpush1.bf16.xpose.msra.mxu0 0
    %586 = vmatprep.subr.bf16.mxu0 0
    %587 = vmatpush1.bf16.xpose.msra.mxu0 0
    %588 = vmatprep.mubr.bf16.mxu0 %v309
    %589 = vmatmul.mubr.bf16.gmra.mrb[0].mxu0 %v308
    %v590 = vpop.f32.mrb[0].mxu0
    %v591 = vadd.f32 %v551, %v590
    %v592 = vpop.f32.mrb[0].mxu0
    %v593 = vpop.f32.mrb[0].mxu0
    %v594 = vpop.f32.mrb[0].mxu0
    %595 = vdwg.mxu0
    %596 = vmatprep.subr.bf16.mxu0 %v375
    %597 = vmatpush1.bf16.xpose.msra.mxu0 %v374
    %598 = vmatprep.subr.bf16.mxu0 0
    %599 = vmatpush1.bf16.xpose.msra.mxu0 0
    %600 = vmatprep.subr.bf16.mxu0 0
    %601 = vmatpush1.bf16.xpose.msra.mxu0 0
    %602 = vmatprep.subr.bf16.mxu0 0
    %603 = vmatpush1.bf16.xpose.msra.mxu0 0
    %604 = vmatprep.subr.bf16.mxu0 0
    %605 = vmatpush1.bf16.xpose.msra.mxu0 0
    %606 = vmatprep.subr.bf16.mxu0 0
    %607 = vmatpush1.bf16.xpose.msra.mxu0 0
    %608 = vmatprep.subr.bf16.mxu0 0
    %609 = vmatpush1.bf16.xpose.msra.mxu0 0
    %610 = vmatprep.subr.bf16.mxu0 0
    %611 = vmatpush1.bf16.xpose.msra.mxu0 0
    %612 = vmatprep.subr.bf16.mxu0 0
    %613 = vmatpush1.bf16.xpose.msra.mxu0 0
    %614 = vmatprep.subr.bf16.mxu0 0
    %615 = vmatpush1.bf16.xpose.msra.mxu0 0
    %616 = vmatprep.subr.bf16.mxu0 0
    %617 = vmatpush1.bf16.xpose.msra.mxu0 0
    %618 = vmatprep.subr.bf16.mxu0 0
    %619 = vmatpush1.bf16.xpose.msra.mxu0 0
    %620 = vmatprep.subr.bf16.mxu0 0
    %621 = vmatpush1.bf16.xpose.msra.mxu0 0
    %622 = vmatprep.subr.bf16.mxu0 0
    %623 = vmatpush1.bf16.xpose.msra.mxu0 0
    %624 = vmatprep.subr.bf16.mxu0 0
    %625 = vmatpush1.bf16.xpose.msra.mxu0 0
    %626 = vmatprep.subr.bf16.mxu0 0
    %627 = vmatpush1.bf16.xpose.msra.mxu0 0
    %628 = vmatprep.mubr.bf16.mxu0 %v311
    %629 = vmatmul.mubr.bf16.gmra.mrb[0].mxu0 %v310
    %v630 = vpop.f32.mrb[0].mxu0
    %v631 = vadd.f32 %v591, %v630
    %v632 = vpop.f32.mrb[0].mxu0
    %v633 = vpop.f32.mrb[0].mxu0
    %v634 = vpop.f32.mrb[0].mxu0
    %635 = vdwg.mxu0
    %636 = vmatprep.subr.bf16.mxu0 %v377
    %637 = vmatpush1.bf16.xpose.msra.mxu0 %v376
    %638 = vmatprep.subr.bf16.mxu0 0
    %639 = vmatpush1.bf16.xpose.msra.mxu0 0
    %640 = vmatprep.subr.bf16.mxu0 0
    %641 = vmatpush1.bf16.xpose.msra.mxu0 0
    %642 = vmatprep.subr.bf16.mxu0 0
    %643 = vmatpush1.bf16.xpose.msra.mxu0 0
    %644 = vmatprep.subr.bf16.mxu0 0
    %645 = vmatpush1.bf16.xpose.msra.mxu0 0
    %646 = vmatprep.subr.bf16.mxu0 0
    %647 = vmatpush1.bf16.xpose.msra.mxu0 0
    %648 = vmatprep.subr.bf16.mxu0 0
    %649 = vmatpush1.bf16.xpose.msra.mxu0 0
    %650 = vmatprep.subr.bf16.mxu0 0
    %651 = vmatpush1.bf16.xpose.msra.mxu0 0
    %652 = vmatprep.subr.bf16.mxu0 0
    %653 = vmatpush1.bf16.xpose.msra.mxu0 0
    %654 = vmatprep.subr.bf16.mxu0 0
    %655 = vmatpush1.bf16.xpose.msra.mxu0 0
    %656 = vmatprep.subr.bf16.mxu0 0
    %657 = vmatpush1.bf16.xpose.msra.mxu0 0
    %658 = vmatprep.subr.bf16.mxu0 0
    %659 = vmatpush1.bf16.xpose.msra.mxu0 0
    %660 = vmatprep.subr.bf16.mxu0 0
    %661 = vmatpush1.bf16.xpose.msra.mxu0 0
    %662 = vmatprep.subr.bf16.mxu0 0
    %663 = vmatpush1.bf16.xpose.msra.mxu0 0
    %664 = vmatprep.subr.bf16.mxu0 0
    %665 = vmatpush1.bf16.xpose.msra.mxu0 0
    %666 = vmatprep.subr.bf16.mxu0 0
    %667 = vmatpush1.bf16.xpose.msra.mxu0 0
    %668 = vmatprep.mubr.bf16.mxu0 %v313
    %669 = vmatmul.mubr.bf16.gmra.mrb[0].mxu0 %v312
    %v670 = vpop.f32.mrb[0].mxu0
    %v671 = vadd.f32 %v631, %v670
    %v672 = vpop.f32.mrb[0].mxu0
    %v673 = vpop.f32.mrb[0].mxu0
    %v674 = vpop.f32.mrb[0].mxu0
    %675 = vdwg.mxu0
    %676 = vmatprep.subr.bf16.mxu0 %v379
    %677 = vmatpush1.bf16.xpose.msra.mxu0 %v378
    %678 = vmatprep.subr.bf16.mxu0 0
    %679 = vmatpush1.bf16.xpose.msra.mxu0 0
    %680 = vmatprep.subr.bf16.mxu0 0
    %681 = vmatpush1.bf16.xpose.msra.mxu0 0
    %682 = vmatprep.subr.bf16.mxu0 0
    %683 = vmatpush1.bf16.xpose.msra.mxu0 0
    %684 = vmatprep.subr.bf16.mxu0 0
    %685 = vmatpush1.bf16.xpose.msra.mxu0 0
    %686 = vmatprep.subr.bf16.mxu0 0
    %687 = vmatpush1.bf16.xpose.msra.mxu0 0
    %688 = vmatprep.subr.bf16.mxu0 0
    %689 = vmatpush1.bf16.xpose.msra.mxu0 0
    %690 = vmatprep.subr.bf16.mxu0 0
    %691 = vmatpush1.bf16.xpose.msra.mxu0 0
    %692 = vmatprep.subr.bf16.mxu0 0
    %693 = vmatpush1.bf16.xpose.msra.mxu0 0
    %694 = vmatprep.subr.bf16.mxu0 0
    %695 = vmatpush1.bf16.xpose.msra.mxu0 0
    %696 = vmatprep.subr.bf16.mxu0 0
    %697 = vmatpush1.bf16.xpose.msra.mxu0 0
    %698 = vmatprep.subr.bf16.mxu0 0
    %699 = vmatpush1.bf16.xpose.msra.mxu0 0
    %700 = vmatprep.subr.bf16.mxu0 0
    %701 = vmatpush1.bf16.xpose.msra.mxu0 0
    %702 = vmatprep.subr.bf16.mxu0 0
    %703 = vmatpush1.bf16.xpose.msra.mxu0 0
    %704 = vmatprep.subr.bf16.mxu0 0
    %705 = vmatpush1.bf16.xpose.msra.mxu0 0
    %706 = vmatprep.subr.bf16.mxu0 0
    %707 = vmatpush1.bf16.xpose.msra.mxu0 0
    %708 = vmatprep.mubr.bf16.mxu0 %v315
    %709 = vmatmul.mubr.bf16.gmra.mrb[0].mxu0 %v314
    %v710 = vpop.f32.mrb[0].mxu0
    %v711 = vadd.f32 %v671, %v710
    %v712 = vpop.f32.mrb[0].mxu0
    %v713 = vpop.f32.mrb[0].mxu0
    %v714 = vpop.f32.mrb[0].mxu0
    %715 = vdwg.mxu0
    %v716 = vrcp.pop %v299
    %v717 = vmul.f32 %v711, %v716
    %v718 = vunpack.c.l.bf16 %v69
    %v719 = vunpack.c.h.bf16 %v69
    %v720 = vunpack.c.l.bf16 %v70
    %v721 = vunpack.c.h.bf16 %v70
    %v722 = vunpack.c.l.bf16 %v71
    %v723 = vunpack.c.h.bf16 %v71
    %v724 = vunpack.c.l.bf16 %v72
    %v725 = vunpack.c.h.bf16 %v72
    %v726 = vunpack.c.l.bf16 %v73
    %v727 = vunpack.c.h.bf16 %v73
    %v728 = vunpack.c.l.bf16 %v74
    %v729 = vunpack.c.h.bf16 %v74
    %v730 = vunpack.c.l.bf16 %v75
    %v731 = vunpack.c.h.bf16 %v75
    %v732 = vunpack.c.l.bf16 %v76
    %v733 = vunpack.c.h.bf16 %v76
    %v734 = vunpack.c.l.bf16 %v77
    %v735 = vunpack.c.h.bf16 %v77
    %v736 = vunpack.c.l.bf16 %v78
    %v737 = vunpack.c.h.bf16 %v78
    %v738 = vunpack.c.l.bf16 %v79
    %v739 = vunpack.c.h.bf16 %v79
    %v740 = vunpack.c.l.bf16 %v80
    %v741 = vunpack.c.h.bf16 %v80
    %v742 = vunpack.c.l.bf16 %v81
    %v743 = vunpack.c.h.bf16 %v81
    %v744 = vunpack.c.l.bf16 %v82
    %v745 = vunpack.c.h.bf16 %v82
    %v746 = vunpack.c.l.bf16 %v83
    %v747 = vunpack.c.h.bf16 %v83
    %v748 = vunpack.c.l.bf16 %v84
    %v749 = vunpack.c.h.bf16 %v84
    %v750 = vmul.f32 %v718, 10.0
    %v751 = vmul.f32 %v719, 10.0
    %v752 = vmul.f32 %v720, 10.0
    %v753 = vmul.f32 %v721, 10.0
    %v754 = vmul.f32 %v722, 10.0
    %v755 = vmul.f32 %v723, 10.0
    %v756 = vmul.f32 %v724, 10.0
    %v757 = vmul.f32 %v725, 10.0
    %v758 = vmul.f32 %v726, 10.0
    %v759 = vmul.f32 %v727, 10.0
    %v760 = vmul.f32 %v728, 10.0
    %v761 = vmul.f32 %v729, 10.0
    %v762 = vmul.f32 %v730, 10.0
    %v763 = vmul.f32 %v731, 10.0
    %v764 = vmul.f32 %v732, 10.0
    %v765 = vmul.f32 %v733, 10.0
    %v766 = vmul.f32 %v734, 10.0
    %v767 = vmul.f32 %v735, 10.0
    %v768 = vmul.f32 %v736, 10.0
    %v769 = vmul.f32 %v737, 10.0
    %v770 = vmul.f32 %v738, 10.0
    %v771 = vmul.f32 %v739, 10.0
    %v772 = vmul.f32 %v740, 10.0
    %v773 = vmul.f32 %v741, 10.0
    %v774 = vmul.f32 %v742, 10.0
    %v775 = vmul.f32 %v743, 10.0
    %v776 = vmul.f32 %v744, 10.0
    %v777 = vmul.f32 %v745, 10.0
    %v778 = vmul.f32 %v746, 10.0
    %v779 = vmul.f32 %v747, 10.0
    %v780 = vmul.f32 %v748, 10.0
    %v781 = vmul.f32 %v749, 10.0
    %v782 = vmax.f32 %v750, %v752
    %v783 = vmax.f32 %v751, %v753
    %v784 = vmax.f32 %v782, %v754
    %v785 = vmax.f32 %v783, %v755
    %v786 = vmax.f32 %v784, %v756
    %v787 = vmax.f32 %v785, %v757
    %v788 = vmax.f32 %v786, %v758
    %v789 = vmax.f32 %v787, %v759
    %v790 = vmax.f32 %v788, %v760
    %v791 = vmax.f32 %v789, %v761
    %v792 = vmax.f32 %v790, %v762
    %v793 = vmax.f32 %v791, %v763
    %v794 = vmax.f32 %v792, %v764
    %v795 = vmax.f32 %v793, %v765
    %v796 = vmax.f32 %v794, %v795
    %797 = vmax.xlane.f32.xlu0 %v796
    %v798 = vpop.xlane.xlu0 %797
    %v799 = vmax.f32 %v766, %v768
    %v800 = vmax.f32 %v767, %v769
    %v801 = vmax.f32 %v799, %v770
    %v802 = vmax.f32 %v800, %v771
    %v803 = vmax.f32 %v801, %v772
    %v804 = vmax.f32 %v802, %v773
    %v805 = vmax.f32 %v803, %v774
    %v806 = vmax.f32 %v804, %v775
    %v807 = vmax.f32 %v805, %v776
    %v808 = vmax.f32 %v806, %v777
    %v809 = vmax.f32 %v807, %v778
    %v810 = vmax.f32 %v808, %v779
    %v811 = vmax.f32 %v809, %v780
    %v812 = vmax.f32 %v810, %v781
    %v813 = vmax.f32 %v811, %v812
    %814 = vmax.xlane.f32.xlu0 %v813
    %v815 = vpop.xlane.xlu0 %814
    %v816 = vsub.f32 %v750, %v798
    %v817 = vsub.f32 %v751, %v798
    %v818 = vsub.f32 %v752, %v798
    %v819 = vsub.f32 %v753, %v798
    %v820 = vsub.f32 %v754, %v798
    %v821 = vsub.f32 %v755, %v798
    %v822 = vsub.f32 %v756, %v798
    %v823 = vsub.f32 %v757, %v798
    %v824 = vsub.f32 %v758, %v798
    %v825 = vsub.f32 %v759, %v798
    %v826 = vsub.f32 %v760, %v798
    %v827 = vsub.f32 %v761, %v798
    %v828 = vsub.f32 %v762, %v798
    %v829 = vsub.f32 %v763, %v798
    %v830 = vsub.f32 %v764, %v798
    %v831 = vsub.f32 %v765, %v798
    %v832 = vsub.f32 %v766, %v815
    %v833 = vsub.f32 %v767, %v815
    %v834 = vsub.f32 %v768, %v815
    %v835 = vsub.f32 %v769, %v815
    %v836 = vsub.f32 %v770, %v815
    %v837 = vsub.f32 %v771, %v815
    %v838 = vsub.f32 %v772, %v815
    %v839 = vsub.f32 %v773, %v815
    %v840 = vsub.f32 %v774, %v815
    %v841 = vsub.f32 %v775, %v815
    %v842 = vsub.f32 %v776, %v815
    %v843 = vsub.f32 %v777, %v815
    %v844 = vsub.f32 %v778, %v815
    %v845 = vsub.f32 %v779, %v815
    %v846 = vsub.f32 %v780, %v815
    %v847 = vsub.f32 %v781, %v815
    %v848 = vmul.f32 %v816, 1.442695
    %v849 = vpow.pop %v848
    %v850 = vmul.f32 %v817, 1.442695
    %v851 = vpow.pop %v850
    %v852 = vmul.f32 %v818, 1.442695
    %v853 = vpow.pop %v852
    %v854 = vmul.f32 %v819, 1.442695
    %v855 = vpow.pop %v854
    %v856 = vmul.f32 %v820, 1.442695
    %v857 = vpow.pop %v856
    %v858 = vmul.f32 %v821, 1.442695
    %v859 = vpow.pop %v858
    %v860 = vmul.f32 %v822, 1.442695
    %v861 = vpow.pop %v860
    %v862 = vmul.f32 %v823, 1.442695
    %v863 = vpow.pop %v862
    %v864 = vmul.f32 %v824, 1.442695
    %v865 = vpow.pop %v864
    %v866 = vmul.f32 %v825, 1.442695
    %v867 = vpow.pop %v866
    %v868 = vmul.f32 %v826, 1.442695
    %v869 = vpow.pop %v868
    %v870 = vmul.f32 %v827, 1.442695
    %v871 = vpow.pop %v870
    %v872 = vmul.f32 %v828, 1.442695
    %v873 = vpow.pop %v872
    %v874 = vmul.f32 %v829, 1.442695
    %v875 = vpow.pop %v874
    %v876 = vmul.f32 %v830, 1.442695
    %v877 = vpow.pop %v876
    %v878 = vmul.f32 %v831, 1.442695
    %v879 = vpow.pop %v878
    %v880 = vmul.f32 %v832, 1.442695
    %v881 = vpow.pop %v880
    %v882 = vmul.f32 %v833, 1.442695
    %v883 = vpow.pop %v882
    %v884 = vmul.f32 %v834, 1.442695
    %v885 = vpow.pop %v884
    %v886 = vmul.f32 %v835, 1.442695
    %v887 = vpow.pop %v886
    %v888 = vmul.f32 %v836, 1.442695
    %v889 = vpow.pop %v888
    %v890 = vmul.f32 %v837, 1.442695
    %v891 = vpow.pop %v890
    %v892 = vmul.f32 %v838, 1.442695
    %v893 = vpow.pop %v892
    %v894 = vmul.f32 %v839, 1.442695
    %v895 = vpow.pop %v894
    %v896 = vmul.f32 %v840, 1.442695
    %v897 = vpow.pop %v896
    %v898 = vmul.f32 %v841, 1.442695
    %v899 = vpow.pop %v898
    %v900 = vmul.f32 %v842, 1.442695
    %v901 = vpow.pop %v900
    %v902 = vmul.f32 %v843, 1.442695
    %v903 = vpow.pop %v902
    %v904 = vmul.f32 %v844, 1.442695
    %v905 = vpow.pop %v904
    %v906 = vmul.f32 %v845, 1.442695
    %v907 = vpow.pop %v906
    %v908 = vmul.f32 %v846, 1.442695
    %v909 = vpow.pop %v908
    %v910 = vmul.f32 %v847, 1.442695
    %v911 = vpow.pop %v910
    %v912 = vadd.f32 %v849, %v851
    %v913 = vadd.f32 %v912, %v853
    %v914 = vadd.f32 %v913, %v855
    %v915 = vadd.f32 %v914, %v857
    %v916 = vadd.f32 %v915, %v859
    %v917 = vadd.f32 %v916, %v861
    %v918 = vadd.f32 %v917, %v863
    %v919 = vadd.f32 %v918, %v865
    %v920 = vadd.f32 %v919, %v867
    %v921 = vadd.f32 %v920, %v869
    %v922 = vadd.f32 %v921, %v871
    %v923 = vadd.f32 %v922, %v873
    %v924 = vadd.f32 %v923, %v875
    %v925 = vadd.f32 %v924, %v877
    %v926 = vadd.f32 %v925, %v879
    %927 = vadd.xlane.f32.xlu0 %v926
    %v928 = vpop.xlane.xlu0 %927
    %v929 = vadd.f32 %v881, %v883
    %v930 = vadd.f32 %v929, %v885
    %v931 = vadd.f32 %v930, %v887
    %v932 = vadd.f32 %v931, %v889
    %v933 = vadd.f32 %v932, %v891
    %v934 = vadd.f32 %v933, %v893
    %v935 = vadd.f32 %v934, %v895
    %v936 = vadd.f32 %v935, %v897
    %v937 = vadd.f32 %v936, %v899
    %v938 = vadd.f32 %v937, %v901
    %v939 = vadd.f32 %v938, %v903
    %v940 = vadd.f32 %v939, %v905
    %v941 = vadd.f32 %v940, %v907
    %v942 = vadd.f32 %v941, %v909
    %v943 = vadd.f32 %v942, %v911
    %944 = vadd.xlane.f32.xlu0 %v943
    %v945 = vpop.xlane.xlu0 %944
    %v946 = vlog2.pop %v928
    %v947 = vmul.f32 %v946, 0.6931472
    %v948 = vlog2.pop %v945
    %v949 = vmul.f32 %v948, 0.6931472
    %v950 = vadd.f32 %v798, %v947
    %v951 = vadd.f32 %v815, %v949
    %v952 = vlaneseq
    %v953 = vshrl.u32 %v952, 7
    %v954 = vlaneseq
    %v955 = vand.u32 %v954, 127
    %vm956 = vcmp.lt.s32.totalorder %v953, 4
    %v957 = vsel %vm956, 0, 1
    %vm958 = vcmp.ne.s32.totalorder %v955, %v957
    %v959 = vsel %vm958, %v717, 0.0
    %vm960 = vcmask 130048
    %v961 = vsel %vm960, %v959, 0.0
    %962 = vadd.xlane.f32.xlu0 %v961
    %v963 = vpop.xlane.xlu0 %962
    %v964 = vrot.slane %v963, 4
    %v965 = vadd.f32 %v963, %v964
    %v966 = vrot.slane %v965, 2
    %v967 = vadd.f32 %v965, %v966
    %v968 = vrot.slane %v967, 1
    %v969 = vadd.f32 %v967, %v968
    %s970 = vtos %v969
    %v971 = vstv %s970
    %v972 = vmul.f32 %v971, 2.5
    %v973 = vadd.s32 %v953, 8
    %vm974 = vcmp.lt.s32.totalorder %v953, 2
    %vm975 = vcmp.lt.s32.totalorder %v973, 2
    %v976 = vsel %vm974, 1.0, 2.0
    %v977 = vsel %vm975, 1.0, 2.0
    %v978 = vmul.f32 %v976, %v950
    %v979 = vmul.f32 %v977, %v951
    %vm980 = vcmask 7168
    %v981 = vsel %vm980, %v978, 0.0
    %v982 = vsel %vm980, %v979, 0.0
    %v983 = vadd.f32 %v981, %v982
    %984 = vadd.xlane.f32.xlu0 %v983
    %v985 = vpop.xlane.xlu0 %984
    %v986 = vrot.slane %v985, 4
    %v987 = vadd.f32 %v985, %v986
    %v988 = vrot.slane %v987, 2
    %v989 = vadd.f32 %v987, %v988
    %v990 = vrot.slane %v989, 1
    %v991 = vadd.f32 %v989, %v990
    %s992 = vtos %v991
    %v993 = vstv %s992
    %v994 = vsub.f32 %v993, %v972
    %v995 = vmul.f32 %v994, 0.033333335
    %vm996 = vcmask 0
    %997 = vst.msk [vmem:[#allocation9] sm:$0x1] %vm996, %v995
    %v998 = vrot.slane %v87, 4
    %v999 = vadd.f32 %v87, %v998
    %v1000 = vrot.slane %v999, 2
    %v1001 = vadd.f32 %v999, %v1000
    %v1002 = vrot.slane %v1001, 1
    %v1003 = vadd.f32 %v1001, %v1002
    %v1004 = vrot.slane %v88, 4
    %v1005 = vadd.f32 %v88, %v1004
    %v1006 = vrot.slane %v1005, 2
    %v1007 = vadd.f32 %v1005, %v1006
    %v1008 = vrot.slane %v1007, 1
    %v1009 = vadd.f32 %v1007, %v1008
    %v1010 = vrot.slane %v89, 4
    %v1011 = vadd.f32 %v89, %v1010
    %v1012 = vrot.slane %v1011, 2
    %v1013 = vadd.f32 %v1011, %v1012
    %v1014 = vrot.slane %v1013, 1
    %v1015 = vadd.f32 %v1013, %v1014
    %v1016 = vrot.slane %v90, 4
    %v1017 = vadd.f32 %v90, %v1016
    %v1018 = vrot.slane %v1017, 2
    %v1019 = vadd.f32 %v1017, %v1018
    %v1020 = vrot.slane %v1019, 1
    %v1021 = vadd.f32 %v1019, %v1020
    %v1022 = vrot.slane %v91, 4
    %v1023 = vadd.f32 %v91, %v1022
    %v1024 = vrot.slane %v1023, 2
    %v1025 = vadd.f32 %v1023, %v1024
    %v1026 = vrot.slane %v1025, 1
    %v1027 = vadd.f32 %v1025, %v1026
    %v1028 = vrot.slane %v92, 4
    %v1029 = vadd.f32 %v92, %v1028
    %v1030 = vrot.slane %v1029, 2
    %v1031 = vadd.f32 %v1029, %v1030
    %v1032 = vrot.slane %v1031, 1
    %v1033 = vadd.f32 %v1031, %v1032
    %v1034 = vrot.slane %v93, 4
    %v1035 = vadd.f32 %v93, %v1034
    %v1036 = vrot.slane %v1035, 2
    %v1037 = vadd.f32 %v1035, %v1036
    %v1038 = vrot.slane %v1037, 1
    %v1039 = vadd.f32 %v1037, %v1038
    %v1040 = vrot.slane %v94, 4
    %v1041 = vadd.f32 %v94, %v1040
    %v1042 = vrot.slane %v1041, 2
    %v1043 = vadd.f32 %v1041, %v1042
    %v1044 = vrot.slane %v1043, 1
    %v1045 = vadd.f32 %v1043, %v1044
    %v1046 = vrot.slane %v95, 4
    %v1047 = vadd.f32 %v95, %v1046
    %v1048 = vrot.slane %v1047, 2
    %v1049 = vadd.f32 %v1047, %v1048
    %v1050 = vrot.slane %v1049, 1
    %v1051 = vadd.f32 %v1049, %v1050
    %v1052 = vrot.slane %v96, 4
    %v1053 = vadd.f32 %v96, %v1052
    %v1054 = vrot.slane %v1053, 2
    %v1055 = vadd.f32 %v1053, %v1054
    %v1056 = vrot.slane %v1055, 1
    %v1057 = vadd.f32 %v1055, %v1056
    %v1058 = vrot.slane %v97, 4
    %v1059 = vadd.f32 %v97, %v1058
    %v1060 = vrot.slane %v1059, 2
    %v1061 = vadd.f32 %v1059, %v1060
    %v1062 = vrot.slane %v1061, 1
    %v1063 = vadd.f32 %v1061, %v1062
    %v1064 = vrot.slane %v98, 4
    %v1065 = vadd.f32 %v98, %v1064
    %v1066 = vrot.slane %v1065, 2
    %v1067 = vadd.f32 %v1065, %v1066
    %v1068 = vrot.slane %v1067, 1
    %v1069 = vadd.f32 %v1067, %v1068
    %v1070 = vrot.slane %v99, 4
    %v1071 = vadd.f32 %v99, %v1070
    %v1072 = vrot.slane %v1071, 2
    %v1073 = vadd.f32 %v1071, %v1072
    %v1074 = vrot.slane %v1073, 1
    %v1075 = vadd.f32 %v1073, %v1074
    %v1076 = vrot.slane %v100, 4
    %v1077 = vadd.f32 %v100, %v1076
    %v1078 = vrot.slane %v1077, 2
    %v1079 = vadd.f32 %v1077, %v1078
    %v1080 = vrot.slane %v1079, 1
    %v1081 = vadd.f32 %v1079, %v1080
    %v1082 = vrot.slane %v101, 4
    %v1083 = vadd.f32 %v101, %v1082
    %v1084 = vrot.slane %v1083, 2
    %v1085 = vadd.f32 %v1083, %v1084
    %v1086 = vrot.slane %v1085, 1
    %v1087 = vadd.f32 %v1085, %v1086
    %v1088 = vrot.slane %v102, 4
    %v1089 = vadd.f32 %v102, %v1088
    %v1090 = vrot.slane %v1089, 2
    %v1091 = vadd.f32 %v1089, %v1090
    %v1092 = vrot.slane %v1091, 1
    %v1093 = vadd.f32 %v1091, %v1092
    %v1094 = vmul.f32 %v85, 0.9
    %v1095 = vmul.f32 %v86, 0.9
    %v1096 = vmul.f32 %v1003, 0.0125
    %v1097 = vmul.f32 %v1009, 0.0125
    %v1098 = vmul.f32 %v1015, 0.0125
    %v1099 = vmul.f32 %v1021, 0.0125
    %v1100 = vmul.f32 %v1027, 0.0125
    %v1101 = vmul.f32 %v1033, 0.0125
    %v1102 = vmul.f32 %v1039, 0.0125
    %v1103 = vmul.f32 %v1045, 0.0125
    %v1104 = vmul.f32 %v1051, 0.0125
    %v1105 = vmul.f32 %v1057, 0.0125
    %v1106 = vmul.f32 %v1063, 0.0125
    %v1107 = vmul.f32 %v1069, 0.0125
    %v1108 = vmul.f32 %v1075, 0.0125
    %v1109 = vmul.f32 %v1081, 0.0125
    %v1110 = vmul.f32 %v1087, 0.0125
    %v1111 = vmul.f32 %v1093, 0.0125
    %v1128 = vcombine.low %v1096, %v1097
    %v1129 = vcombine.low %v1098, %v1099
    %v1130 = vcombine.low %v1100, %v1101
    %v1131 = vcombine.low %v1102, %v1103
    %v1133 = vunpack.c.l.s4 1966171168
    %v1134 = vunpack.c.0.s8 %v1133
    %v1135 = vlaneseq
    %v1136 = vshrl.u32 %v1135, 7
    %v1137 = vsub.s32 %v1134, %v1136
    %v1138 = vrot.slane %v1128, %v1137
    %v1140 = vunpack.c.l.s4 1966171168
    %v1141 = vunpack.c.0.s8 %v1140
    %v1142 = vlaneseq
    %v1143 = vshrl.u32 %v1142, 7
    %v1144 = vsub.s32 %v1141, %v1143
    %v1145 = vrot.slane %v1129, %v1144
    %v1147 = vunpack.c.l.s4 1966171168
    %v1148 = vunpack.c.0.s8 %v1147
    %v1149 = vlaneseq
    %v1150 = vshrl.u32 %v1149, 7
    %v1151 = vsub.s32 %v1148, %v1150
    %v1152 = vrot.slane %v1130, %v1151
    %v1154 = vunpack.c.l.s4 1966171168
    %v1155 = vunpack.c.0.s8 %v1154
    %v1156 = vlaneseq
    %v1157 = vshrl.u32 %v1156, 7
    %v1158 = vsub.s32 %v1155, %v1157
    %v1159 = vrot.slane %v1131, %v1158
    %v1160 = vcombine.low %v1138, %v1145
    %v1161 = vcombine.low %v1152, %v1159
    %v1163 = vunpack.c.l.s4 1966171168
    %v1164 = vunpack.c.0.s8 %v1163
    %v1165 = vlaneseq
    %v1166 = vshrl.u32 %v1165, 7
    %v1167 = vsub.s32 %v1164, %v1166
    %v1168 = vrot.slane %v1160, %v1167
    %v1170 = vunpack.c.l.s4 1966171168
    %v1171 = vunpack.c.0.s8 %v1170
    %v1172 = vlaneseq
    %v1173 = vshrl.u32 %v1172, 7
    %v1174 = vsub.s32 %v1171, %v1173
    %v1175 = vrot.slane %v1161, %v1174
    %v1176 = vcombine.low %v1168, %v1175
    %v1177 = vcombine.low %v1104, %v1105
    %v1178 = vcombine.low %v1106, %v1107
    %v1179 = vcombine.low %v1108, %v1109
    %v1180 = vcombine.low %v1110, %v1111
    %v1182 = vunpack.c.l.s4 1966171168
    %v1183 = vunpack.c.0.s8 %v1182
    %v1184 = vlaneseq
    %v1185 = vshrl.u32 %v1184, 7
    %v1186 = vsub.s32 %v1183, %v1185
    %v1187 = vrot.slane %v1177, %v1186
    %v1189 = vunpack.c.l.s4 1966171168
    %v1190 = vunpack.c.0.s8 %v1189
    %v1191 = vlaneseq
    %v1192 = vshrl.u32 %v1191, 7
    %v1193 = vsub.s32 %v1190, %v1192
    %v1194 = vrot.slane %v1178, %v1193
    %v1196 = vunpack.c.l.s4 1966171168
    %v1197 = vunpack.c.0.s8 %v1196
    %v1198 = vlaneseq
    %v1199 = vshrl.u32 %v1198, 7
    %v1200 = vsub.s32 %v1197, %v1199
    %v1201 = vrot.slane %v1179, %v1200
    %v1203 = vunpack.c.l.s4 1966171168
    %v1204 = vunpack.c.0.s8 %v1203
    %v1205 = vlaneseq
    %v1206 = vshrl.u32 %v1205, 7
    %v1207 = vsub.s32 %v1204, %v1206
    %v1208 = vrot.slane %v1180, %v1207
    %v1209 = vcombine.low %v1187, %v1194
    %v1210 = vcombine.low %v1201, %v1208
    %v1212 = vunpack.c.l.s4 1966171168
    %v1213 = vunpack.c.0.s8 %v1212
    %v1214 = vlaneseq
    %v1215 = vshrl.u32 %v1214, 7
    %v1216 = vsub.s32 %v1213, %v1215
    %v1217 = vrot.slane %v1209, %v1216
    %v1219 = vunpack.c.l.s4 1966171168
    %v1220 = vunpack.c.0.s8 %v1219
    %v1221 = vlaneseq
    %v1222 = vshrl.u32 %v1221, 7
    %v1223 = vsub.s32 %v1220, %v1222
    %v1224 = vrot.slane %v1210, %v1223
    %v1225 = vcombine.low %v1217, %v1224
    %v1228 = vadd.f32 %v1094, %v1176
    %v1229 = vadd.f32 %v1095, %v1225
    %1230 = vst [vmem:[#allocation10] sm:$0xff] %v1228
    %1231 = vst [vmem:[#allocation10 + $0x8] sm:$0xff] %v1229
    // Predicated region
    $region30: #{tpu_custom_call.1} parent=1 // pred_check
      _
    $region31: #{tpu_custom_call.1} parent=1 // pred_check_branch
      %1233 = sbr.rel (0) target = $region33
    $region32: #{tpu_custom_call.1} parent=1 // pred_region
      %s1235 = ssub.s32 16, 16
      %1236 = vsyncadd [#allocation5], %s1235
      %s1238 = sshll.u32 [#allocation9], 4
      %s1239 = int_to_ptr.vmem [resolvable:$true] %s1238
      %1241 = dma.vmem_to_hbm [thread:$0]  %s1239, 16, %s4, [#allocation5]
    $region33: #{tpu_custom_call.1} parent=1 // pred_fallthru
      _
    // Predicated region
    $region34: #{tpu_custom_call.1} parent=1 // pred_check
      _
    $region35: #{tpu_custom_call.1} parent=1 // pred_check_branch
      %1243 = sbr.rel (0) target = $region37
    $region36: #{tpu_custom_call.1} parent=1 // pred_region
      %s1245 = ssub.s32 256, 256
      %1246 = vsyncadd [#allocation11], %s1245
      %s1248 = sshll.u32 [#allocation10], 4
      %s1249 = int_to_ptr.vmem [resolvable:$true] %s1248
      %1251 = dma.vmem_to_hbm [thread:$0]  %s1249, 256, %s5, [#allocation11]
    $region37: #{tpu_custom_call.1} parent=1 // pred_fallthru
      _
    // Predicated region
    $region38: #{tpu_custom_call.1} parent=1 // pred_check
      _
    $region39: #{tpu_custom_call.1} parent=1 // pred_check_branch
      %1253 = sbr.rel (0) target = $region41
    $region40: #{tpu_custom_call.1} parent=1 // pred_region
      %1254 = dma.done [#allocation5], 16
    $region41: #{tpu_custom_call.1} parent=1 // pred_fallthru
      _
    // Predicated region
    $region42: #{tpu_custom_call.1} parent=1 // pred_check
      _
    $region43: #{tpu_custom_call.1} parent=1 // pred_check_branch
      %1256 = sbr.rel (0) target = $region45
    $region44: #{tpu_custom_call.1} parent=1 // pred_region
      %1257 = dma.done [#allocation11], 256
    $region45: #{tpu_custom_call.1} parent=1 // pred_fallthru
      _
    %1258 = vsyncpa [#allocation4], 1
    %1259 = vsyncpa [#allocation7], 1
    %1260 = vsyncpa [#allocation5], 1
    %1261 = vsyncpa [#allocation11], 1

</llo_original>
